<compile_context>
chip_gen: v5e
topology: v5e:2x2
jax: 0.10.0
libtpu: 0.0.40
codegen_flags: <defaults>
</compile_context>

<pallas_src>
import functools
import math

import jax
import jax.numpy as jnp
import numpy as np
from jax.experimental import pallas as pl
from jax.experimental.pallas import tpu as pltpu

LN_EPS = 1e-5  # torch.nn.LayerNorm default


def _layernorm_f32(x, w_ref, b_ref):
    mu = jnp.mean(x, axis=-1, keepdims=True)
    var = jnp.mean(jnp.square(x - mu), axis=-1, keepdims=True)
    return (x - mu) * jax.lax.rsqrt(var + LN_EPS) * w_ref[...] + b_ref[...]


# --------------------------- kernel 1: pair bias --------------------------- #
def _pair_bias_kernel(z_ref, ln1w_ref, ln1b_ref, wb_ref, bias_ref):
    # z_ref: [1, TI, N, D]; wb_ref: [D, H] bf16; bias_ref: [1, TI, N, H] bf16
    ti, n, d = z_ref.shape[1], z_ref.shape[2], z_ref.shape[3]
    h = wb_ref.shape[1]
    zf = z_ref[0].astype(jnp.float32).reshape(ti * n, d)
    zn = _layernorm_f32(zf, ln1w_ref, ln1b_ref)
    b = jnp.dot(zn.astype(jnp.bfloat16), wb_ref[...],
                preferred_element_type=jnp.float32)              # [TI*N, H]
    # TODO(synk): store head-major ([1, H, TI, N]) directly once minor-dim
    # reshapes are safe for arbitrary N in Mosaic; for now a tiny bf16 XLA
    # transpose in the wrapper makes the bias lane-dense for kernel 2.
    bias_ref[0] = b.reshape(ti, n, h).astype(jnp.bfloat16)


# ----------------------- kernel 2: row-wise attention ---------------------- #
def _triangle_attn_kernel(z_ref, bias_ref, ln1w_ref, ln1b_ref, wcat_ref,
                          gbias_ref, wo_ref, obias_ref, out_ref, wa_ref,
                          *, n_head, c_head):
    # z_ref:    [1, TQ, N, D]  pair-rep rows handled by this grid step (f32)
    # bias_ref: [1, H, N, N]   pair bias, bf16, resident across the row-tile axis
    # wcat_ref: [D, 4*H*C]     concat(Wq*c^-0.5, Wk, Wv, Wgate), bf16
    # wo_ref:   [H*C, D]       output projection (no bias), bf16
    # wa_ref:   [TQ*N, H*C]    bf16 VMEM scratch for the gated per-head outputs
    tq, n, d = z_ref.shape[1], z_ref.shape[2], z_ref.shape[3]
    hc = n_head * c_head

    zf = z_ref[0].astype(jnp.float32).reshape(tq * n, d)
    zn = _layernorm_f32(zf, ln1w_ref, ln1b_ref)                  # f32 stats

    # Fused Q/K/V/gate projection: one MXU pass over zn (f32 accumulation).
    qkvg = jnp.dot(zn.astype(jnp.bfloat16), wcat_ref[...],
                   preferred_element_type=jnp.float32)           # [TQ*N, 4*HC]
    qkv_bf = qkvg[:, :3 * hc].astype(jnp.bfloat16)               # single cast pass
    gbias = gbias_ref[...]                                       # [1, HC]

    for h in range(n_head):                                      # static, H small
        s0 = h * c_head
        qh = qkv_bf[:, s0:s0 + c_head].reshape(tq, n, c_head)
        kh = qkv_bf[:, hc + s0:hc + s0 + c_head].reshape(tq, n, c_head)
        vh = qkv_bf[:, 2 * hc + s0:2 * hc + s0 + c_head].reshape(tq, n, c_head)

        # Row-batched q @ k^T on the MXU; pair bias (shared over rows) in f32.
        logits = jnp.einsum('ric,rjc->rij', qh, kh,
                            preferred_element_type=jnp.float32)  # [TQ, N, N]
        logits = logits + bias_ref[0, h].astype(jnp.float32)

        # Manual softmax: f32 max & denominator, bf16 exp (EUP on v6e/v7x),
        # approx reciprocal, normalization applied to the small attn@v output.
        m = jnp.max(logits, axis=-1, keepdims=True)
        p = jnp.exp((logits - m).astype(jnp.bfloat16))           # [TQ, N, N] bf16
        l = jnp.sum(p, axis=-1, keepdims=True, dtype=jnp.float32)
        inv_l = pl.reciprocal(l, approx=True)                    # [TQ, N, 1] f32

        o_h = jnp.einsum('rij,rjc->ric', p, vh,
                         preferred_element_type=jnp.float32)     # [TQ, N, C]
        o_h = o_h * inv_l

        g_h = jax.nn.sigmoid(qkvg[:, 3 * hc + s0:3 * hc + s0 + c_head]
                             + gbias[:, s0:s0 + c_head])         # [TQ*N, C] f32
        wa_ref[:, s0:s0 + c_head] = (
            o_h.reshape(tq * n, c_head) * g_h).astype(jnp.bfloat16)

    attn = jnp.dot(wa_ref[...], wo_ref[...],
                   preferred_element_type=jnp.float32)           # [TQ*N, D]

    # TODO(synk): stochastic row-wise dropout (and the 1/(1-p) rescale) omitted --
    # the module passes a ones mask; eval-mode semantics => identity.
    out = zf + attn + obias_ref[...]                             # residual in f32
    out_ref[0] = out.reshape(tq, n, d).astype(out_ref.dtype)


# -------------------------------- wrapper ---------------------------------- #
def _full_spec(a):
    nd = a.ndim
    return pl.BlockSpec(a.shape, lambda *idx, _nd=nd: (0,) * _nd)


def _vmem_capacity_bytes():
    cap = 64 << 20                         # conservative default (v7x-sized)
    try:
        info = pltpu.get_tpu_info()
        cap = int(getattr(info, "vmem_capacity_bytes", cap))
    except Exception:
        pass
    return cap


def _largest_fitting_divisor(n, bytes_fn, budget):
    for t in range(n, 0, -1):
        if n % t == 0 and bytes_fn(t) <= budget:
            return t
    return 1


def _vmem_limit(needed, cap):
    # Leave headroom for Mosaic-internal scratch; never request the full VMEM.
    return int(min(0.85 * cap, max(needed + (8 << 20), 32 << 20)))


def triangle_attention_starting_node(z_raw, params, *, c, n_head, tq=None, ti=None):
    B, N, N2, D = z_raw.shape
    assert N == N2, "pair representation must be square"
    HC = n_head * c

    ln1w, ln1b = params["ln1_w"], params["ln1_b"]
    wb_bf = params["wb"].astype(jnp.bfloat16)                    # [D, H]
    # 1/sqrt(c) folded into the Q projection (free in XLA; saves in-kernel passes)
    wcat_bf = jnp.concatenate(
        [params["wq"] * (c ** -0.5), params["wk"], params["wv"], params["wg"]],
        axis=1).astype(jnp.bfloat16)                             # [D, 4*HC]
    wo_bf = params["wo"].astype(jnp.bfloat16)                    # [HC, D]
    gbias = params["g_bias"]                                     # [1, HC]
    obias = params["out_bias"]                                   # [1, D]

    cap = _vmem_capacity_bytes()
    budget = int(0.6 * cap)

    # ---- kernel 1: pair bias  b[b,i,j,h] = sum_c LN(Z)[b,i,j,c] * Wb[c,h] ----
    def bias_bytes(t):
        z_in = 2 * t * N * D * 4                      # input tile, double-buffered
        out = 2 * t * N * n_head * 2                  # bf16 output, double-buffered
        zwork = t * N * D * (4 + 2)                   # f32 zn + bf16 copy
        return z_in + out + zwork + D * n_head * 2 + 2 * D * 4 + (2 << 20)

    if ti is None:
        ti = _largest_fitting_divisor(N, bias_bytes, budget)
    assert N % ti == 0

    bias_args = [z_raw, ln1w, ln1b, wb_bf]
    bias_bnnh = pl.pallas_call(
        _pair_bias_kernel,
        out_shape=jax.ShapeDtypeStruct((B, N, N, n_head), jnp.bfloat16),
        grid_spec=pltpu.PrefetchScalarGridSpec(
            num_scalar_prefetch=0,
            grid=(B, N // ti),
            in_specs=[pl.BlockSpec((1, ti, N, D), lambda b, it: (b, it, 0, 0))]
                     + [_full_spec(a) for a in bias_args[1:]],
            out_specs=pl.BlockSpec((1, ti, N, n_head), lambda b, it: (b, it, 0, 0)),
        ),
        compiler_params=pltpu.CompilerParams(
            dimension_semantics=("parallel", "parallel"),
            vmem_limit_bytes=_vmem_limit(bias_bytes(ti), cap)),
    )(*bias_args)
    # Tiny bf16 relayout in XLA so kernel 2 gets a lane-dense, head-leading bias.
    bias_bhqk = jnp.transpose(bias_bnnh, (0, 3, 1, 2))           # [B, H, N, N]

    # ---- kernel 2: row-wise gated multi-head attention + residual ----
    # TODO(synk): for very large N on v7x, add flash-style key tiling (online
    # softmax over an inner N//TK loop) instead of relying on TQ shrinkage alone.
    def attn_bytes(t):
        z_io = 2 * 2 * t * N * D * 4                  # z in + out, double-buffered
        bias = 2 * n_head * N * N * 2                 # resident bf16 bias (2 bufs)
        weights = (D * 4 * HC + HC * D) * 2 + (HC + D) * 4
        proj = t * N * 4 * HC * 4 + t * N * 3 * HC * 2  # f32 qkvg + bf16 copy
        logits = t * N * N * (4 + 2) + N * N * 4      # one head's logits/p + bias
        wa = t * N * HC * 2                           # scratch
        return z_io + bias + weights + proj + logits + wa + (2 << 20)

    if tq is None:
        tq = _largest_fitting_divisor(N, attn_bytes, budget)
    assert N % tq == 0

    attn_args = [z_raw, bias_bhqk, ln1w, ln1b, wcat_bf, gbias, wo_bf, obias]
    # TODO(synk): mark the resident bias BlockSpec pipeline_mode=pl.Buffered(1)
    # (saves one H*N*N bf16 VMEM buffer) once single-buffered operands are
    # confirmed supported by the installed Mosaic.
    out = pl.pallas_call(
        functools.partial(_triangle_attn_kernel, n_head=n_head, c_head=c),
        out_shape=jax.ShapeDtypeStruct(z_raw.shape, z_raw.dtype),
        grid_spec=pltpu.PrefetchScalarGridSpec(
            num_scalar_prefetch=0,
            grid=(B, N // tq),
            in_specs=[pl.BlockSpec((1, tq, N, D), lambda b, qt: (b, qt, 0, 0)),
                      pl.BlockSpec((1, n_head, N, N), lambda b, qt: (b, 0, 0, 0))]
                     + [_full_spec(a) for a in attn_args[2:]],
            out_specs=pl.BlockSpec((1, tq, N, D), lambda b, qt: (b, qt, 0, 0)),
            scratch_shapes=[pltpu.VMEM((tq * N, HC), jnp.bfloat16)],
        ),
        compiler_params=pltpu.CompilerParams(
            dimension_semantics=("parallel", "parallel"),
            vmem_limit_bytes=_vmem_limit(attn_bytes(tq), cap)),
    )(*attn_args)
    return out


# ------------------------------ reference ---------------------------------- #
def reference(z_raw, p, *, c, n_head):
    """Pure-JAX f32 reference matching the PyTorch forward (eval-mode dropout)."""
    def ln(x, w, b):
        mu = jnp.mean(x, -1, keepdims=True)
        var = jnp.mean(jnp.square(x - mu), -1, keepdims=True)
        return (x - mu) * jax.lax.rsqrt(var + LN_EPS) * w + b

    B, N, _, D = z_raw.shape
    HC = n_head * c
    zn = ln(z_raw, p["ln1_w"][0], p["ln1_b"][0])
    bias = jnp.einsum('bqkc,ch->bhqk', zn, p["wb"])              # [B, H, N, N]
    q = (zn @ p["wq"]).reshape(B, N, N, n_head, c) * (c ** -0.5)
    k = (zn @ p["wk"]).reshape(B, N, N, n_head, c)
    v = (zn @ p["wv"]).reshape(B, N, N, n_head, c)
    logits = jnp.einsum('brihc,brjhc->brhij', q, k) + bias[:, None]
    w = jax.nn.softmax(logits, axis=-1)
    wa = jnp.einsum('brhij,brjhc->brihc', w, v).reshape(B, N, N, HC)
    gate = jax.nn.sigmoid(zn @ p["wg"] + p["g_bias"][0])
    out = (wa * gate) @ p["wo"]
    return z_raw + out + p["out_bias"][0]


if __name__ == "__main__":
    def make_params(key, d_pair, c, n_head):
        HC = n_head * c
        ks = jax.random.split(key, 9)
        sp = 1.0 / math.sqrt(d_pair)
        so = 1.0 / math.sqrt(HC)
        return {
            "ln1_w": jnp.ones((1, d_pair), jnp.float32)
                     + 0.05 * jax.random.normal(ks[0], (1, d_pair)),
            "ln1_b": 0.05 * jax.random.normal(ks[1], (1, d_pair)),
            # linear_b_weights: std = 1/sqrt(d_pair), as in the module
            "wb": sp * jax.random.normal(ks[2], (d_pair, n_head)),
            "wq": sp * jax.random.normal(ks[3], (d_pair, HC)),
            "wk": sp * jax.random.normal(ks[4], (d_pair, HC)),
            "wv": sp * jax.random.normal(ks[5], (d_pair, HC)),
            # gating linear: module inits weight=0 / bias=1; weight randomized
            # (small) so the gate path does non-trivial work in the test
            "wg": 0.1 * sp * jax.random.normal(ks[6], (d_pair, HC)),
            "g_bias": jnp.ones((1, HC), jnp.float32),
            # o_linear / out_bias: module inits zero; randomized for the test
            "wo": so * jax.random.normal(ks[7], (HC, d_pair)),
            "out_bias": 0.1 * jax.random.normal(ks[8], (1, d_pair)),
        }

    key = jax.random.PRNGKey(0)
    cases = [
        # (B, N, d_pair, c, n_head, tq, ti)
        (2, 16, 128, 32, 4, None, None),   # module defaults, auto tiling
        (1, 32, 128, 32, 4, 8, 8),         # forced tiling: multi-step row grid
    ]
    for (B, N, D_PAIR, C_HEAD, N_HEAD, tq, ti) in cases:
        kz, kp, key = jax.random.split(key, 3)
        z_raw = jax.random.normal(kz, (B, N, N, D_PAIR), jnp.float32)
        params = make_params(kp, D_PAIR, C_HEAD, N_HEAD)

        out = triangle_attention_starting_node(
            z_raw, params, c=C_HEAD, n_head=N_HEAD, tq=tq, ti=ti)
        out = jax.block_until_ready(out)

        ref = reference(z_raw, params, c=C_HEAD, n_head=N_HEAD)
        # bf16 MXU operands / bf16 exp with f32 accumulation -> loosened tolerance.
        np.testing.assert_allclose(np.asarray(out), np.asarray(ref),
                                   rtol=5e-2, atol=5e-2)
    print("KERNEL_OK")
</pallas_src>

<mosaic_0001>
module attributes {stable_mosaic.version = 11 : i64} {
  func.func @_pair_bias_kernel(%arg0: i32, %arg1: i32, %arg2: memref<1x16x16x128xf32, #tpu.memory_space<vmem>>, %arg3: memref<1x128xf32, #tpu.memory_space<vmem>>, %arg4: memref<1x128xf32, #tpu.memory_space<vmem>>, %arg5: memref<128x4xbf16, #tpu.memory_space<vmem>>, %arg6: memref<1x16x16x4xbf16, #tpu.memory_space<vmem>>) attributes {dimension_semantics = [#tpu.dimension_semantics<parallel>, #tpu.dimension_semantics<parallel>], iteration_bounds = array<i64: 2, 1>, scalar_prefetch = 0 : i64, scratch_operands = 0 : i64, tpu.core_type = #tpu.core_type<tc>, window_params = [{transform_indices = @transform_0, window_bounds = array<i64: 1, 16, 16, 128>}, {pipeline_mode = #tpu.pipeline_mode<synchronous>, transform_indices = @transform_1, window_bounds = array<i64: 1, 128>}, {pipeline_mode = #tpu.pipeline_mode<synchronous>, transform_indices = @transform_2, window_bounds = array<i64: 1, 128>}, {pipeline_mode = #tpu.pipeline_mode<synchronous>, transform_indices = @transform_3, window_bounds = array<i64: 128, 4>}, {transform_indices = @transform_4, window_bounds = array<i64: 1, 16, 16, 4>}]} {
    %c0 = arith.constant 0 : index
    %c0_0 = arith.constant 0 : index
    %c0_1 = arith.constant 0 : index
    %c0_2 = arith.constant 0 : index
    %0 = vector.load %arg2[%c0, %c0_0, %c0_1, %c0_2] : memref<1x16x16x128xf32, #tpu.memory_space<vmem>>, vector<1x16x16x128xf32>
    %1 = vector.shape_cast %0 : vector<1x16x16x128xf32> to vector<16x16x128xf32>
    %2 = vector.shape_cast %1 : vector<16x16x128xf32> to vector<256x128xf32>
    %cst = arith.constant dense<0.000000e+00> : vector<256xf32>
    %3 = vector.multi_reduction <add>, %2, %cst [1] : vector<256x128xf32> to vector<256xf32>
    %4 = vector.shape_cast %3 : vector<256xf32> to vector<256x1xf32>
    %cst_3 = arith.constant 1.280000e+02 : f32
    %5 = vector.broadcast %cst_3 : f32 to vector<256x1xf32>
    %6 = arith.divf %4, %5 : vector<256x1xf32>
    %7 = vector.broadcast %6 : vector<256x1xf32> to vector<256x128xf32>
    %8 = arith.subf %2, %7 : vector<256x128xf32>
    %9 = arith.mulf %8, %8 : vector<256x128xf32>
    %cst_4 = arith.constant dense<0.000000e+00> : vector<256xf32>
    %10 = vector.multi_reduction <add>, %9, %cst_4 [1] : vector<256x128xf32> to vector<256xf32>
    %11 = vector.shape_cast %10 : vector<256xf32> to vector<256x1xf32>
    %cst_5 = arith.constant 1.280000e+02 : f32
    %12 = vector.broadcast %cst_5 : f32 to vector<256x1xf32>
    %13 = arith.divf %11, %12 : vector<256x1xf32>
    %14 = vector.broadcast %6 : vector<256x1xf32> to vector<256x128xf32>
    %15 = arith.subf %2, %14 : vector<256x128xf32>
    %cst_6 = arith.constant 9.99999974E-6 : f32
    %16 = vector.broadcast %cst_6 : f32 to vector<256x1xf32>
    %17 = arith.addf %13, %16 : vector<256x1xf32>
    %18 = math.rsqrt %17 : vector<256x1xf32>
    %19 = vector.broadcast %18 : vector<256x1xf32> to vector<256x128xf32>
    %20 = arith.mulf %15, %19 : vector<256x128xf32>
    %c0_7 = arith.constant 0 : index
    %c0_8 = arith.constant 0 : index
    %21 = vector.load %arg3[%c0_7, %c0_8] : memref<1x128xf32, #tpu.memory_space<vmem>>, vector<1x128xf32>
    %22 = vector.broadcast %21 : vector<1x128xf32> to vector<256x128xf32>
    %23 = arith.mulf %20, %22 : vector<256x128xf32>
    %c0_9 = arith.constant 0 : index
    %c0_10 = arith.constant 0 : index
    %24 = vector.load %arg4[%c0_9, %c0_10] : memref<1x128xf32, #tpu.memory_space<vmem>>, vector<1x128xf32>
    %25 = vector.broadcast %24 : vector<1x128xf32> to vector<256x128xf32>
    %26 = arith.addf %23, %25 : vector<256x128xf32>
    %27 = arith.truncf %26 : vector<256x128xf32> to vector<256x128xbf16>
    %c0_11 = arith.constant 0 : index
    %c0_12 = arith.constant 0 : index
    %28 = vector.load %arg5[%c0_11, %c0_12] : memref<128x4xbf16, #tpu.memory_space<vmem>>, vector<128x4xbf16>
    %cst_13 = arith.constant dense<0.000000e+00> : vector<256x4xf32>
    %29 = tpu.matmul %27, %28, %cst_13 {dimension_numbers = #tpu.dot_dimension_numbers<[1], [0], [0], [1], [0, 0, 1, 1], [], []>} : vector<256x128xbf16>, vector<128x4xbf16>, vector<256x4xf32> -> vector<256x4xf32>
    %30 = vector.shape_cast %29 : vector<256x4xf32> to vector<16x16x4xf32>
    %31 = arith.truncf %30 : vector<16x16x4xf32> to vector<16x16x4xbf16>
    %c0_14 = arith.constant 0 : index
    %c0_15 = arith.constant 0 : index
    %c0_16 = arith.constant 0 : index
    %c0_17 = arith.constant 0 : index
    %32 = vector.load %arg6[%c0_14, %c0_15, %c0_16, %c0_17] : memref<1x16x16x4xbf16, #tpu.memory_space<vmem>>, vector<1x16x16x4xbf16>
    %33 = vector.shape_cast %32 : vector<1x16x16x4xbf16> to vector<16x16x4xbf16>
    %34 = vector.shape_cast %31 : vector<16x16x4xbf16> to vector<1x16x16x4xbf16>
    tpu.vector_store %arg6[%c0_14, %c0_15, %c0_16, %c0_17], %34 {strides = array<i32>} : memref<1x16x16x4xbf16, #tpu.memory_space<vmem>>, vector<1x16x16x4xbf16>,
    return
  }
  func.func @transform_0(%arg0: i32, %arg1: i32) -> (i32, i32, i32, i32) {
    %c0_i32 = arith.constant 0 : i32
    %c0_i32_0 = arith.constant 0 : i32
    %c0_i32_1 = arith.constant 0 : i32
    return %arg0, %arg1, %c0_i32, %c0_i32_0 : i32, i32, i32, i32
  }
  func.func @transform_1(%arg0: i32, %arg1: i32) -> (i32, i32) {
    %c0_i32 = arith.constant 0 : i32
    %c0_i32_0 = arith.constant 0 : i32
    %c0_i32_1 = arith.constant 0 : i32
    return %c0_i32, %c0_i32_0 : i32, i32
  }
  func.func @transform_2(%arg0: i32, %arg1: i32) -> (i32, i32) {
    %c0_i32 = arith.constant 0 : i32
    %c0_i32_0 = arith.constant 0 : i32
    %c0_i32_1 = arith.constant 0 : i32
    return %c0_i32, %c0_i32_0 : i32, i32
  }
  func.func @transform_3(%arg0: i32, %arg1: i32) -> (i32, i32) {
    %c0_i32 = arith.constant 0 : i32
    %c0_i32_0 = arith.constant 0 : i32
    %c0_i32_1 = arith.constant 0 : i32
    return %c0_i32, %c0_i32_0 : i32, i32
  }
  func.func @transform_4(%arg0: i32, %arg1: i32) -> (i32, i32, i32, i32) {
    %c0_i32 = arith.constant 0 : i32
    %c0_i32_0 = arith.constant 0 : i32
    %c0_i32_1 = arith.constant 0 : i32
    return %arg0, %arg1, %c0_i32, %c0_i32_0 : i32, i32, i32, i32
  }
}

</mosaic_0001>

<llo_original>
// kernel: tpu_custom_call.1
$region0: #{tpu_custom_call.1}
  #allocation0 [shape = 'u32[]', space=smem, size = 0x4, offset = 0x4, fixed_abs, tag = 'smem constant byte address 0x4 - core index']
  #allocation1 [shape = 'u32[72,128]{1,0:T(1,128)}', space=vmem, size = 0x9000, scoped, tag = 'internal scratch']
  %s0 = inlined_call_operand.hbm [shape: f32[2,16,16,128], index: 0, kind: input, shape index: {}]
  %s1 = inlined_call_operand.vmem [shape: f32[1,128], index: 1, kind: input, shape index: {}]
  %s2 = inlined_call_operand.vmem [shape: f32[1,128], index: 2, kind: input, shape index: {}]
  %s3 = inlined_call_operand.vmem [shape: bf16[128,4], index: 3, kind: input, shape index: {}]
  %s4 = inlined_call_operand.vmem [shape: bf16[2,16,16,4], index: 4, kind: output, shape index: {}]
  %s5 = sld [smem:[#allocation0]]
  $region53: #{tpu_custom_call.1} parent=0
    _
  %s7 = ssub.s32 1, %s5
  %s8 = scalar_select 0, %s7, %s5
  $region1: #{tpu_custom_call.1} parent=0
    #allocation2 [shape = 'u8[262144]{0}', space=vmem, size = 0x40000, scoped, tag = 'input window, operand 0']
    #allocation3 [shape = 's32[2]{0}', space=sflag, size = 0x8, scoped, tag = 'scoped memory for tpu_custom_call.1']
    %9 = vsyncpa [#allocation3], 0
    %s10 = scalar_lea.sflag [#allocation3], 1
    %11 = vsyncpa %s10, 0
    loop: start=0, step=1, limit=4
    $region2: #{tpu_custom_call.1} parent=1 // loop_pre_header
      _
    $region3: #{tpu_custom_call.1} parent=1 // loop_header
      %s13 = sphi 0, %s17
      %p14 = scmp.ge.s32.totalorder %s13, 4
      %s20 = sphi 0, %s32
      %s21 = sphi 0, %s28
      %s22 = sphi 0, %s20
      %s23 = sphi 0, %s21
      %s24 = sphi 0, %s22
      %s25 = sphi 0, %s23
      %s37 = sphi 0, %s39
      %s40 = sphi 0, %s37
      %s41 = sphi 0, %s40
      %s57 = sphi 0, %s41
      %s61 = sphi 0, %s61
      %s63 = sphi 0, %s61
      %s64 = sphi 0, %s63
      %s78 = sphi 0, %s64
      %s82 = sphi 0, %s82
      %s84 = sphi 0, %s82
      %s85 = sphi 0, %s84
      %s99 = sphi 0, %s85
      %s103 = sphi 0, %s103
      %s105 = sphi 0, %s103
      %s106 = sphi 0, %s105
      %s120 = sphi 0, %s106
      %s128 = sphi 0, %s130
      %s131 = sphi 0, %s128
      %s132 = sphi 0, %s131
      %s148 = sphi 0, %s132
    $region4: #{tpu_custom_call.1} parent=1 // loop_header_branch
      %16 = sbr.rel (%p14) target = $region8
    $region5: #{tpu_custom_call.1} parent=1 // loop_body
      %s18 = ssub.s32 %s13, 1
      %s19 = ssub.s32 %s13, 2
      %s26 = sadd.s32 1, %s21
      %p27 = scmp.ge.s32.totalorder %s26, 1
      %s28 = scalar_select %p27, 0, %s26
      %s29 = sadd.s32 1, %s20
      %s30 = scalar_select %p27, %s29, %s20
      %p31 = scmp.ge.s32.totalorder %s30, 2
      %s32 = scalar_select %p31, 0, %s30
      %s33 = ssub.s32 %s20, %s32
      %s34 = ssub.s32 %s21, %s28
      %s35 = sor.u32 %s33, %s34
      %p36 = scmp.eq.s32.totalorder %s35, 0
      %s38 = sadd.s32 %s37, 1
      %s39 = scalar_select %p36, %s37, %s38
      %p42 = pneg %p36
      %p43 = scmp.eq.s32.totalorder %s13, 1
      %p44 = por %p42, %p43
      %p45 = scmp.ne.s32.totalorder %s37, %s40
      %p46 = scmp.eq.s32.totalorder %s13, 0
      %p47 = por %p45, %p46
      %p48 = scmp.ne.s32.totalorder %s37, %s40
      %p49 = scmp.eq.s32.totalorder %s18, 1
      %p50 = por %p48, %p49
      %p51 = scmp.ne.s32.totalorder %s40, %s41
      %p52 = scmp.eq.s32.totalorder %s18, 0
      %p53 = por %p51, %p52
      %p54 = scmp.ne.s32.totalorder %s40, %s41
      %p55 = scmp.eq.s32.totalorder %s19, 1
      %p56 = por %p54, %p55
      %p58 = scmp.ne.s32.totalorder %s41, %s57
      %p59 = scmp.eq.s32.totalorder %s19, 0
      %p60 = por %p58, %p59
      %s62 = sadd.s32 %s61, 1
      %p65 = scmp.eq.s32.totalorder %s13, 1
      %p66 = scmp.ne.s32.totalorder %s61, %s63
      %p67 = scmp.eq.s32.totalorder %s13, 0
      %p68 = por %p66, %p67
      %p69 = scmp.ne.s32.totalorder %s61, %s63
      %p70 = scmp.eq.s32.totalorder %s18, 1
      %p71 = por %p69, %p70
      %p72 = scmp.ne.s32.totalorder %s63, %s64
      %p73 = scmp.eq.s32.totalorder %s18, 0
      %p74 = por %p72, %p73
      %p75 = scmp.ne.s32.totalorder %s63, %s64
      %p76 = scmp.eq.s32.totalorder %s19, 1
      %p77 = por %p75, %p76
      %p79 = scmp.ne.s32.totalorder %s64, %s78
      %p80 = scmp.eq.s32.totalorder %s19, 0
      %p81 = por %p79, %p80
      %s83 = sadd.s32 %s82, 1
      %p86 = scmp.eq.s32.totalorder %s13, 1
      %p87 = scmp.ne.s32.totalorder %s82, %s84
      %p88 = scmp.eq.s32.totalorder %s13, 0
      %p89 = por %p87, %p88
      %p90 = scmp.ne.s32.totalorder %s82, %s84
      %p91 = scmp.eq.s32.totalorder %s18, 1
      %p92 = por %p90, %p91
      %p93 = scmp.ne.s32.totalorder %s84, %s85
      %p94 = scmp.eq.s32.totalorder %s18, 0
      %p95 = por %p93, %p94
      %p96 = scmp.ne.s32.totalorder %s84, %s85
      %p97 = scmp.eq.s32.totalorder %s19, 1
      %p98 = por %p96, %p97
      %p100 = scmp.ne.s32.totalorder %s85, %s99
      %p101 = scmp.eq.s32.totalorder %s19, 0
      %p102 = por %p100, %p101
      %s104 = sadd.s32 %s103, 1
      %p107 = scmp.eq.s32.totalorder %s13, 1
      %p108 = scmp.ne.s32.totalorder %s103, %s105
      %p109 = scmp.eq.s32.totalorder %s13, 0
      %p110 = por %p108, %p109
      %p111 = scmp.ne.s32.totalorder %s103, %s105
      %p112 = scmp.eq.s32.totalorder %s18, 1
      %p113 = por %p111, %p112
      %p114 = scmp.ne.s32.totalorder %s105, %s106
      %p115 = scmp.eq.s32.totalorder %s18, 0
      %p116 = por %p114, %p115
      %p117 = scmp.ne.s32.totalorder %s105, %s106
      %p118 = scmp.eq.s32.totalorder %s19, 1
      %p119 = por %p117, %p118
      %p121 = scmp.ne.s32.totalorder %s106, %s120
      %p122 = scmp.eq.s32.totalorder %s19, 0
      %p123 = por %p121, %p122
      %s124 = ssub.s32 %s20, %s32
      %s125 = ssub.s32 %s21, %s28
      %s126 = sor.u32 %s124, %s125
      %p127 = scmp.eq.s32.totalorder %s126, 0
      %s129 = sadd.s32 %s128, 1
      %s130 = scalar_select %p127, %s128, %s129
      %p133 = pneg %p127
      %p134 = scmp.eq.s32.totalorder %s13, 1
      %p135 = por %p133, %p134
      %p136 = scmp.ne.s32.totalorder %s128, %s131
      %p137 = scmp.eq.s32.totalorder %s13, 0
      %p138 = por %p136, %p137
      %p139 = scmp.ne.s32.totalorder %s128, %s131
      %p140 = scmp.eq.s32.totalorder %s18, 1
      %p141 = por %p139, %p140
      %p142 = scmp.ne.s32.totalorder %s131, %s132
      %p143 = scmp.eq.s32.totalorder %s18, 0
      %p144 = por %p142, %p143
      %p145 = scmp.ne.s32.totalorder %s131, %s132
      %p146 = scmp.eq.s32.totalorder %s19, 1
      %p147 = por %p145, %p146
      %p149 = scmp.ne.s32.totalorder %s132, %s148
      %p150 = scmp.eq.s32.totalorder %s19, 0
      %p151 = por %p149, %p150
      %p152 = scmp.le.s32.totalorder 1, %s13
      %p153 = scmp.lt.s32.totalorder %s13, 3
      %p154 = pnand %p152, %p153
      %p155 = pneg %p154
      // Predicated region
      $region9: #{tpu_custom_call.1} parent=5 // pred_check
        _
      $region10: #{tpu_custom_call.1} parent=5 // pred_check_branch
        %157 = sbr.rel (%p154) target = $region12
      $region11: #{tpu_custom_call.1} parent=5 // pred_region
        %s158 = ssub.s32 %s13, 1
        // Predicated region
        $region13: #{tpu_custom_call.1} parent=11 // pred_check
          %p159 = pneg %p74
        $region14: #{tpu_custom_call.1} parent=11 // pred_check_branch
          %161 = sbr.rel (%p159) target = $region16
        $region15: #{tpu_custom_call.1} parent=11 // pred_region
          _
        $region16: #{tpu_custom_call.1} parent=11 // pred_fallthru
          _
        // Predicated region
        $region17: #{tpu_custom_call.1} parent=11 // pred_check
          %p162 = pneg %p95
        $region18: #{tpu_custom_call.1} parent=11 // pred_check_branch
          %164 = sbr.rel (%p162) target = $region20
        $region19: #{tpu_custom_call.1} parent=11 // pred_region
          _
        $region20: #{tpu_custom_call.1} parent=11 // pred_fallthru
          _
        // Predicated region
        $region21: #{tpu_custom_call.1} parent=11 // pred_check
          %p165 = pneg %p116
        $region22: #{tpu_custom_call.1} parent=11 // pred_check_branch
          %167 = sbr.rel (%p165) target = $region24
        $region23: #{tpu_custom_call.1} parent=11 // pred_region
          _
        $region24: #{tpu_custom_call.1} parent=11 // pred_fallthru
          _
      $region12: #{tpu_custom_call.1} parent=5 // pred_fallthru
        _
      %p168 = scmp.lt.s32.totalorder %s13, 2
      // Predicated region
      $region25: #{tpu_custom_call.1} parent=5 // pred_check
        %p169 = pneg %p168
      $region26: #{tpu_custom_call.1} parent=5 // pred_check_branch
        %171 = sbr.rel (%p169) target = $region28
      $region27: #{tpu_custom_call.1} parent=5 // pred_region
        // Predicated region
        $region29: #{tpu_custom_call.1} parent=27 // pred_check
          %p172 = pneg %p47
        $region30: #{tpu_custom_call.1} parent=27 // pred_check_branch
          %174 = sbr.rel (%p172) target = $region32
        $region31: #{tpu_custom_call.1} parent=27 // pred_region
          %s175 = sand.u32 %s37, 1
          %s176 = scalar_lea.sflag [#allocation3], %s175
          %s177 = sand.u32 %s37, 1
          %s178 = smul.addr %s177, 256
          %s179 = scalar_lea.vmem [#allocation2], %s178
          %s180 = smul.u32 16, %s21
          %182 = vsyncadd %s176, 0
          %s183 = smul.addr %s180, 2
          %s184 = smul.addr %s20, 32
          %s185 = sadd.s32 %s183, %s184
          %s186 = smul.addr %s185, 8
          %s187 = scalar_lea.hbm %s0, %s186
          %s188 = sshll.u32 %s187, 4
          %s189 = int_to_ptr.hbm [resolvable:$true] %s188
          %s190 = sshll.u32 %s179, 4
          %s191 = int_to_ptr.vmem [resolvable:$true] %s190
          %196 = dma.hbm_to_vmem [thread:$0]  %s189, 4096, %s191, %s176, 128, 128, 8
        $region32: #{tpu_custom_call.1} parent=27 // pred_fallthru
          _
      $region28: #{tpu_custom_call.1} parent=5 // pred_fallthru
        _
      %p197 = scmp.le.s32.totalorder 1, %s13
      %p198 = scmp.lt.s32.totalorder %s13, 3
      %p199 = pnand %p197, %p198
      %p200 = pneg %p199
      // Predicated region
      $region33: #{tpu_custom_call.1} parent=5 // pred_check
        _
      $region34: #{tpu_custom_call.1} parent=5 // pred_check_branch
        %202 = sbr.rel (%p199) target = $region36
      $region35: #{tpu_custom_call.1} parent=5 // pred_region
        %s203 = ssub.s32 %s13, 1
        %s204 = sand.u32 %s40, 1
        %s205 = scalar_lea.sflag [#allocation3], %s204
        %s206 = sand.u32 %s40, 1
        %s207 = smul.addr %s206, 256
        %s208 = scalar_lea.vmem [#allocation2], %s207
        // Predicated region
        $region37: #{tpu_custom_call.1} parent=35 // pred_check
          %p209 = pneg %p53
        $region38: #{tpu_custom_call.1} parent=35 // pred_check_branch
          %211 = sbr.rel (%p209) target = $region40
        $region39: #{tpu_custom_call.1} parent=35 // pred_region
          %213 = dma.done %s205, 4096
        $region40: #{tpu_custom_call.1} parent=35 // pred_fallthru
          _
        %s214 = sand.u32 %s40, 1
        %s215 = scalar_lea.sflag [#allocation3], %s214
        %s216 = sand.u32 %s40, 1
        %s217 = smul.addr %s216, 256
        %s218 = scalar_lea.vmem [#allocation2], %s217
        %p219 = pneg %p53
        %p220 = pneg %p50
        %p221 = pneg %p74
        %p222 = pneg %p71
        %p223 = pneg %p95
        %p224 = pneg %p92
        %p225 = pneg %p116
        %p226 = pneg %p113
        %p227 = pneg %p144
        %p228 = pneg %p141
        %s229 = smul.u32 16, %s23
        %p230 = scmp.lt.s32.totalorder %s22, 1
        %s231 = scalar_select %p230, %s22, 1
        %p232 = scmp.lt.s32.totalorder %s229, 15
        %s233 = scalar_select %p232, %s229, 15
        %s234 = smul.addr %s233, 2
        %s235 = smul.addr %s231, 32
        %s236 = sadd.s32 %s234, %s235
        %s237 = smul.addr %s236, 4
        %s238 = scalar_lea.vmem %s4, %s237
        %s239 = smul.u32 16, %s23
        %s240 = smul.u32 16, %s23
        %p241 = scmp.lt.s32.totalorder %s22, 1
        %s242 = scalar_select %p241, %s22, 1
        %p243 = scmp.lt.s32.totalorder %s240, 15
        %s244 = scalar_select %p243, %s240, 15
        %s245 = smul.addr %s244, 2
        %s246 = smul.addr %s242, 32
        %s247 = sadd.s32 %s245, %s246
        %s248 = smul.addr %s247, 4
        %s249 = scalar_lea.vmem %s4, %s248
        %s250 = smul.u32 16, %s23
        %v251 = vld [vmem:[%s208] sm:$0xff]
        %v252 = vld [vmem:[%s208 + $0x8] sm:$0xff]
        %v253 = vld [vmem:[%s208 + $0x10] sm:$0xff]
        %v254 = vld [vmem:[%s208 + $0x18] sm:$0xff]
        %v255 = vld [vmem:[%s208 + $0x20] sm:$0xff]
        %v256 = vld [vmem:[%s208 + $0x28] sm:$0xff]
        %v257 = vld [vmem:[%s208 + $0x30] sm:$0xff]
        %v258 = vld [vmem:[%s208 + $0x38] sm:$0xff]
        %v259 = vld [vmem:[%s208 + $0x40] sm:$0xff]
        %v260 = vld [vmem:[%s208 + $0x48] sm:$0xff]
        %v261 = vld [vmem:[%s208 + $0x50] sm:$0xff]
        %v262 = vld [vmem:[%s208 + $0x58] sm:$0xff]
        %v263 = vld [vmem:[%s208 + $0x60] sm:$0xff]
        %v264 = vld [vmem:[%s208 + $0x68] sm:$0xff]
        %v265 = vld [vmem:[%s208 + $0x70] sm:$0xff]
        %v266 = vld [vmem:[%s208 + $0x78] sm:$0xff]
        %v267 = vld [vmem:[%s208 + $0x80] sm:$0xff]
        %v268 = vld [vmem:[%s208 + $0x88] sm:$0xff]
        %v269 = vld [vmem:[%s208 + $0x90] sm:$0xff]
        %v270 = vld [vmem:[%s208 + $0x98] sm:$0xff]
        %v271 = vld [vmem:[%s208 + $0xa0] sm:$0xff]
        %v272 = vld [vmem:[%s208 + $0xa8] sm:$0xff]
        %v273 = vld [vmem:[%s208 + $0xb0] sm:$0xff]
        %v274 = vld [vmem:[%s208 + $0xb8] sm:$0xff]
        %v275 = vld [vmem:[%s208 + $0xc0] sm:$0xff]
        %v276 = vld [vmem:[%s208 + $0xc8] sm:$0xff]
        %v277 = vld [vmem:[%s208 + $0xd0] sm:$0xff]
        %v278 = vld [vmem:[%s208 + $0xd8] sm:$0xff]
        %v279 = vld [vmem:[%s208 + $0xe0] sm:$0xff]
        %v280 = vld [vmem:[%s208 + $0xe8] sm:$0xff]
        %v281 = vld [vmem:[%s208 + $0xf0] sm:$0xff]
        %v282 = vld [vmem:[%s208 + $0xf8] sm:$0xff]
        %283 = vadd.xlane.f32.xlu0 %v251
        %v284 = vpop.xlane.xlu0 %283
        %285 = vadd.xlane.f32.xlu0 %v252
        %v286 = vpop.xlane.xlu0 %285
        %287 = vadd.xlane.f32.xlu0 %v253
        %v288 = vpop.xlane.xlu0 %287
        %289 = vadd.xlane.f32.xlu0 %v254
        %v290 = vpop.xlane.xlu0 %289
        %291 = vadd.xlane.f32.xlu0 %v255
        %v292 = vpop.xlane.xlu0 %291
        %293 = vadd.xlane.f32.xlu0 %v256
        %v294 = vpop.xlane.xlu0 %293
        %295 = vadd.xlane.f32.xlu0 %v257
        %v296 = vpop.xlane.xlu0 %295
        %297 = vadd.xlane.f32.xlu0 %v258
        %v298 = vpop.xlane.xlu0 %297
        %299 = vadd.xlane.f32.xlu0 %v259
        %v300 = vpop.xlane.xlu0 %299
        %301 = vadd.xlane.f32.xlu0 %v260
        %v302 = vpop.xlane.xlu0 %301
        %303 = vadd.xlane.f32.xlu0 %v261
        %v304 = vpop.xlane.xlu0 %303
        %305 = vadd.xlane.f32.xlu0 %v262
        %v306 = vpop.xlane.xlu0 %305
        %307 = vadd.xlane.f32.xlu0 %v263
        %v308 = vpop.xlane.xlu0 %307
        %309 = vadd.xlane.f32.xlu0 %v264
        %v310 = vpop.xlane.xlu0 %309
        %311 = vadd.xlane.f32.xlu0 %v265
        %v312 = vpop.xlane.xlu0 %311
        %313 = vadd.xlane.f32.xlu0 %v266
        %v314 = vpop.xlane.xlu0 %313
        %315 = vadd.xlane.f32.xlu0 %v267
        %v316 = vpop.xlane.xlu0 %315
        %317 = vadd.xlane.f32.xlu0 %v268
        %v318 = vpop.xlane.xlu0 %317
        %319 = vadd.xlane.f32.xlu0 %v269
        %v320 = vpop.xlane.xlu0 %319
        %321 = vadd.xlane.f32.xlu0 %v270
        %v322 = vpop.xlane.xlu0 %321
        %323 = vadd.xlane.f32.xlu0 %v271
        %v324 = vpop.xlane.xlu0 %323
        %325 = vadd.xlane.f32.xlu0 %v272
        %v326 = vpop.xlane.xlu0 %325
        %327 = vadd.xlane.f32.xlu0 %v273
        %v328 = vpop.xlane.xlu0 %327
        %329 = vadd.xlane.f32.xlu0 %v274
        %v330 = vpop.xlane.xlu0 %329
        %331 = vadd.xlane.f32.xlu0 %v275
        %v332 = vpop.xlane.xlu0 %331
        %333 = vadd.xlane.f32.xlu0 %v276
        %v334 = vpop.xlane.xlu0 %333
        %335 = vadd.xlane.f32.xlu0 %v277
        %v336 = vpop.xlane.xlu0 %335
        %337 = vadd.xlane.f32.xlu0 %v278
        %v338 = vpop.xlane.xlu0 %337
        %339 = vadd.xlane.f32.xlu0 %v279
        %v340 = vpop.xlane.xlu0 %339
        %341 = vadd.xlane.f32.xlu0 %v280
        %v342 = vpop.xlane.xlu0 %341
        %343 = vadd.xlane.f32.xlu0 %v281
        %v344 = vpop.xlane.xlu0 %343
        %345 = vadd.xlane.f32.xlu0 %v282
        %v346 = vpop.xlane.xlu0 %345
        %v347 = vrcp.pop 128.0
        %v348 = vmul.f32 128.0, %v347
        %v349 = vsub.f32 1.0, %v348
        %v350 = vmul.f32 %v347, %v349
        %v351 = vadd.f32 %v347, %v350
        %vm352 = vweird.f32 %v347
        %v353 = vsel %vm352, %v347, %v351
        %v354 = vmul.f32 %v284, %v353
        %v355 = vmul.f32 %v286, %v353
        %v356 = vmul.f32 %v288, %v353
        %v357 = vmul.f32 %v290, %v353
        %v358 = vmul.f32 %v292, %v353
        %v359 = vmul.f32 %v294, %v353
        %v360 = vmul.f32 %v296, %v353
        %v361 = vmul.f32 %v298, %v353
        %v362 = vmul.f32 %v300, %v353
        %v363 = vmul.f32 %v302, %v353
        %v364 = vmul.f32 %v304, %v353
        %v365 = vmul.f32 %v306, %v353
        %v366 = vmul.f32 %v308, %v353
        %v367 = vmul.f32 %v310, %v353
        %v368 = vmul.f32 %v312, %v353
        %v369 = vmul.f32 %v314, %v353
        %v370 = vmul.f32 %v316, %v353
        %v371 = vmul.f32 %v318, %v353
        %v372 = vmul.f32 %v320, %v353
        %v373 = vmul.f32 %v322, %v353
        %v374 = vmul.f32 %v324, %v353
        %v375 = vmul.f32 %v326, %v353
        %v376 = vmul.f32 %v328, %v353
        %v377 = vmul.f32 %v330, %v353
        %v378 = vmul.f32 %v332, %v353
        %v379 = vmul.f32 %v334, %v353
        %v380 = vmul.f32 %v336, %v353
        %v381 = vmul.f32 %v338, %v353
        %v382 = vmul.f32 %v340, %v353
        %v383 = vmul.f32 %v342, %v353
        %v384 = vmul.f32 %v344, %v353
        %v385 = vmul.f32 %v346, %v353
        %v386 = vsub.f32 %v251, %v354
        %v387 = vsub.f32 %v252, %v355
        %v388 = vsub.f32 %v253, %v356
        %v389 = vsub.f32 %v254, %v357
        %v390 = vsub.f32 %v255, %v358
        %v391 = vsub.f32 %v256, %v359
        %v392 = vsub.f32 %v257, %v360
        %v393 = vsub.f32 %v258, %v361
        %v394 = vsub.f32 %v259, %v362
        %v395 = vsub.f32 %v260, %v363
        %v396 = vsub.f32 %v261, %v364
        %v397 = vsub.f32 %v262, %v365
        %v398 = vsub.f32 %v263, %v366
        %v399 = vsub.f32 %v264, %v367
        %v400 = vsub.f32 %v265, %v368
        %v401 = vsub.f32 %v266, %v369
        %v402 = vsub.f32 %v267, %v370
        %v403 = vsub.f32 %v268, %v371
        %v404 = vsub.f32 %v269, %v372
        %v405 = vsub.f32 %v270, %v373
        %v406 = vsub.f32 %v271, %v374
        %v407 = vsub.f32 %v272, %v375
        %v408 = vsub.f32 %v273, %v376
        %v409 = vsub.f32 %v274, %v377
        %v410 = vsub.f32 %v275, %v378
        %v411 = vsub.f32 %v276, %v379
        %v412 = vsub.f32 %v277, %v380
        %v413 = vsub.f32 %v278, %v381
        %v414 = vsub.f32 %v279, %v382
        %v415 = vsub.f32 %v280, %v383
        %v416 = vsub.f32 %v281, %v384
        %v417 = vsub.f32 %v282, %v385
        %v418 = vmul.f32 %v386, %v386
        %v419 = vmul.f32 %v387, %v387
        %v420 = vmul.f32 %v388, %v388
        %v421 = vmul.f32 %v389, %v389
        %v422 = vmul.f32 %v390, %v390
        %v423 = vmul.f32 %v391, %v391
        %v424 = vmul.f32 %v392, %v392
        %v425 = vmul.f32 %v393, %v393
        %v426 = vmul.f32 %v394, %v394
        %v427 = vmul.f32 %v395, %v395
        %v428 = vmul.f32 %v396, %v396
        %v429 = vmul.f32 %v397, %v397
        %v430 = vmul.f32 %v398, %v398
        %v431 = vmul.f32 %v399, %v399
        %v432 = vmul.f32 %v400, %v400
        %v433 = vmul.f32 %v401, %v401
        %v434 = vmul.f32 %v402, %v402
        %v435 = vmul.f32 %v403, %v403
        %v436 = vmul.f32 %v404, %v404
        %v437 = vmul.f32 %v405, %v405
        %v438 = vmul.f32 %v406, %v406
        %v439 = vmul.f32 %v407, %v407
        %v440 = vmul.f32 %v408, %v408
        %v441 = vmul.f32 %v409, %v409
        %v442 = vmul.f32 %v410, %v410
        %v443 = vmul.f32 %v411, %v411
        %v444 = vmul.f32 %v412, %v412
        %v445 = vmul.f32 %v413, %v413
        %v446 = vmul.f32 %v414, %v414
        %v447 = vmul.f32 %v415, %v415
        %v448 = vmul.f32 %v416, %v416
        %v449 = vmul.f32 %v417, %v417
        %450 = vadd.xlane.f32.xlu0 %v418
        %v451 = vpop.xlane.xlu0 %450
        %452 = vadd.xlane.f32.xlu0 %v419
        %v453 = vpop.xlane.xlu0 %452
        %454 = vadd.xlane.f32.xlu0 %v420
        %v455 = vpop.xlane.xlu0 %454
        %456 = vadd.xlane.f32.xlu0 %v421
        %v457 = vpop.xlane.xlu0 %456
        %458 = vadd.xlane.f32.xlu0 %v422
        %v459 = vpop.xlane.xlu0 %458
        %460 = vadd.xlane.f32.xlu0 %v423
        %v461 = vpop.xlane.xlu0 %460
        %462 = vadd.xlane.f32.xlu0 %v424
        %v463 = vpop.xlane.xlu0 %462
        %464 = vadd.xlane.f32.xlu0 %v425
        %v465 = vpop.xlane.xlu0 %464
        %466 = vadd.xlane.f32.xlu0 %v426
        %v467 = vpop.xlane.xlu0 %466
        %468 = vadd.xlane.f32.xlu0 %v427
        %v469 = vpop.xlane.xlu0 %468
        %470 = vadd.xlane.f32.xlu0 %v428
        %v471 = vpop.xlane.xlu0 %470
        %472 = vadd.xlane.f32.xlu0 %v429
        %v473 = vpop.xlane.xlu0 %472
        %474 = vadd.xlane.f32.xlu0 %v430
        %v475 = vpop.xlane.xlu0 %474
        %476 = vadd.xlane.f32.xlu0 %v431
        %v477 = vpop.xlane.xlu0 %476
        %478 = vadd.xlane.f32.xlu0 %v432
        %v479 = vpop.xlane.xlu0 %478
        %480 = vadd.xlane.f32.xlu0 %v433
        %v481 = vpop.xlane.xlu0 %480
        %482 = vadd.xlane.f32.xlu0 %v434
        %v483 = vpop.xlane.xlu0 %482
        %484 = vadd.xlane.f32.xlu0 %v435
        %v485 = vpop.xlane.xlu0 %484
        %486 = vadd.xlane.f32.xlu0 %v436
        %v487 = vpop.xlane.xlu0 %486
        %488 = vadd.xlane.f32.xlu0 %v437
        %v489 = vpop.xlane.xlu0 %488
        %490 = vadd.xlane.f32.xlu0 %v438
        %v491 = vpop.xlane.xlu0 %490
        %492 = vadd.xlane.f32.xlu0 %v439
        %v493 = vpop.xlane.xlu0 %492
        %494 = vadd.xlane.f32.xlu0 %v440
        %v495 = vpop.xlane.xlu0 %494
        %496 = vadd.xlane.f32.xlu0 %v441
        %v497 = vpop.xlane.xlu0 %496
        %498 = vadd.xlane.f32.xlu0 %v442
        %v499 = vpop.xlane.xlu0 %498
        %500 = vadd.xlane.f32.xlu0 %v443
        %v501 = vpop.xlane.xlu0 %500
        %502 = vadd.xlane.f32.xlu0 %v444
        %v503 = vpop.xlane.xlu0 %502
        %504 = vadd.xlane.f32.xlu0 %v445
        %v505 = vpop.xlane.xlu0 %504
        %506 = vadd.xlane.f32.xlu0 %v446
        %v507 = vpop.xlane.xlu0 %506
        %508 = vadd.xlane.f32.xlu0 %v447
        %v509 = vpop.xlane.xlu0 %508
        %510 = vadd.xlane.f32.xlu0 %v448
        %v511 = vpop.xlane.xlu0 %510
        %512 = vadd.xlane.f32.xlu0 %v449
        %v513 = vpop.xlane.xlu0 %512
        %v514 = vmul.f32 %v451, %v353
        %v515 = vmul.f32 %v453, %v353
        %v516 = vmul.f32 %v455, %v353
        %v517 = vmul.f32 %v457, %v353
        %v518 = vmul.f32 %v459, %v353
        %v519 = vmul.f32 %v461, %v353
        %v520 = vmul.f32 %v463, %v353
        %v521 = vmul.f32 %v465, %v353
        %v522 = vmul.f32 %v467, %v353
        %v523 = vmul.f32 %v469, %v353
        %v524 = vmul.f32 %v471, %v353
        %v525 = vmul.f32 %v473, %v353
        %v526 = vmul.f32 %v475, %v353
        %v527 = vmul.f32 %v477, %v353
        %v528 = vmul.f32 %v479, %v353
        %v529 = vmul.f32 %v481, %v353
        %v530 = vmul.f32 %v483, %v353
        %v531 = vmul.f32 %v485, %v353
        %v532 = vmul.f32 %v487, %v353
        %v533 = vmul.f32 %v489, %v353
        %v534 = vmul.f32 %v491, %v353
        %v535 = vmul.f32 %v493, %v353
        %v536 = vmul.f32 %v495, %v353
        %v537 = vmul.f32 %v497, %v353
        %v538 = vmul.f32 %v499, %v353
        %v539 = vmul.f32 %v501, %v353
        %v540 = vmul.f32 %v503, %v353
        %v541 = vmul.f32 %v505, %v353
        %v542 = vmul.f32 %v507, %v353
        %v543 = vmul.f32 %v509, %v353
        %v544 = vmul.f32 %v511, %v353
        %v545 = vmul.f32 %v513, %v353
        %v546 = vadd.f32 %v514, 1e-05
        %v547 = vadd.f32 %v515, 1e-05
        %v548 = vadd.f32 %v516, 1e-05
        %v549 = vadd.f32 %v517, 1e-05
        %v550 = vadd.f32 %v518, 1e-05
        %v551 = vadd.f32 %v519, 1e-05
        %v552 = vadd.f32 %v520, 1e-05
        %v553 = vadd.f32 %v521, 1e-05
        %v554 = vadd.f32 %v522, 1e-05
        %v555 = vadd.f32 %v523, 1e-05
        %v556 = vadd.f32 %v524, 1e-05
        %v557 = vadd.f32 %v525, 1e-05
        %v558 = vadd.f32 %v526, 1e-05
        %v559 = vadd.f32 %v527, 1e-05
        %v560 = vadd.f32 %v528, 1e-05
        %v561 = vadd.f32 %v529, 1e-05
        %v562 = vadd.f32 %v530, 1e-05
        %v563 = vadd.f32 %v531, 1e-05
        %v564 = vadd.f32 %v532, 1e-05
        %v565 = vadd.f32 %v533, 1e-05
        %v566 = vadd.f32 %v534, 1e-05
        %v567 = vadd.f32 %v535, 1e-05
        %v568 = vadd.f32 %v536, 1e-05
        %v569 = vadd.f32 %v537, 1e-05
        %v570 = vadd.f32 %v538, 1e-05
        %v571 = vadd.f32 %v539, 1e-05
        %v572 = vadd.f32 %v540, 1e-05
        %v573 = vadd.f32 %v541, 1e-05
        %v574 = vadd.f32 %v542, 1e-05
        %v575 = vadd.f32 %v543, 1e-05
        %v576 = vadd.f32 %v544, 1e-05
        %v577 = vadd.f32 %v545, 1e-05
        %v578 = vrsqrt.pop %v546
        %v579 = vmul.f32 %v578, %v546
        %v580 = vmul.f32 %v579, %v578
        %v581 = vmul.f32 0.5, %v580
        %v582 = vsub.f32 1.5, %v581
        %v583 = vmul.f32 %v578, %v582
        %vm584 = vweird.f32 %v546
        %vm585 = vweird.f32 %v578
        %vm586 = vmor %vm584, %vm585
        %v587 = vsel %vm586, %v578, %v583
        %v588 = vrsqrt.pop %v547
        %v589 = vmul.f32 %v588, %v547
        %v590 = vmul.f32 %v589, %v588
        %v591 = vmul.f32 0.5, %v590
        %v592 = vsub.f32 1.5, %v591
        %v593 = vmul.f32 %v588, %v592
        %vm594 = vweird.f32 %v547
        %vm595 = vweird.f32 %v588
        %vm596 = vmor %vm594, %vm595
        %v597 = vsel %vm596, %v588, %v593
        %v598 = vrsqrt.pop %v548
        %v599 = vmul.f32 %v598, %v548
        %v600 = vmul.f32 %v599, %v598
        %v601 = vmul.f32 0.5, %v600
        %v602 = vsub.f32 1.5, %v601
        %v603 = vmul.f32 %v598, %v602
        %vm604 = vweird.f32 %v548
        %vm605 = vweird.f32 %v598
        %vm606 = vmor %vm604, %vm605
        %v607 = vsel %vm606, %v598, %v603
        %v608 = vrsqrt.pop %v549
        %v609 = vmul.f32 %v608, %v549
        %v610 = vmul.f32 %v609, %v608
        %v611 = vmul.f32 0.5, %v610
        %v612 = vsub.f32 1.5, %v611
        %v613 = vmul.f32 %v608, %v612
        %vm614 = vweird.f32 %v549
        %vm615 = vweird.f32 %v608
        %vm616 = vmor %vm614, %vm615
        %v617 = vsel %vm616, %v608, %v613
        %v618 = vrsqrt.pop %v550
        %v619 = vmul.f32 %v618, %v550
        %v620 = vmul.f32 %v619, %v618
        %v621 = vmul.f32 0.5, %v620
        %v622 = vsub.f32 1.5, %v621
        %v623 = vmul.f32 %v618, %v622
        %vm624 = vweird.f32 %v550
        %vm625 = vweird.f32 %v618
        %vm626 = vmor %vm624, %vm625
        %v627 = vsel %vm626, %v618, %v623
        %v628 = vrsqrt.pop %v551
        %v629 = vmul.f32 %v628, %v551
        %v630 = vmul.f32 %v629, %v628
        %v631 = vmul.f32 0.5, %v630
        %v632 = vsub.f32 1.5, %v631
        %v633 = vmul.f32 %v628, %v632
        %vm634 = vweird.f32 %v551
        %vm635 = vweird.f32 %v628
        %vm636 = vmor %vm634, %vm635
        %v637 = vsel %vm636, %v628, %v633
        %v638 = vrsqrt.pop %v552
        %v639 = vmul.f32 %v638, %v552
        %v640 = vmul.f32 %v639, %v638
        %v641 = vmul.f32 0.5, %v640
        %v642 = vsub.f32 1.5, %v641
        %v643 = vmul.f32 %v638, %v642
        %vm644 = vweird.f32 %v552
        %vm645 = vweird.f32 %v638
        %vm646 = vmor %vm644, %vm645
        %v647 = vsel %vm646, %v638, %v643
        %v648 = vrsqrt.pop %v553
        %v649 = vmul.f32 %v648, %v553
        %v650 = vmul.f32 %v649, %v648
        %v651 = vmul.f32 0.5, %v650
        %v652 = vsub.f32 1.5, %v651
        %v653 = vmul.f32 %v648, %v652
        %vm654 = vweird.f32 %v553
        %vm655 = vweird.f32 %v648
        %vm656 = vmor %vm654, %vm655
        %v657 = vsel %vm656, %v648, %v653
        %v658 = vrsqrt.pop %v554
        %v659 = vmul.f32 %v658, %v554
        %v660 = vmul.f32 %v659, %v658
        %v661 = vmul.f32 0.5, %v660
        %v662 = vsub.f32 1.5, %v661
        %v663 = vmul.f32 %v658, %v662
        %vm664 = vweird.f32 %v554
        %vm665 = vweird.f32 %v658
        %vm666 = vmor %vm664, %vm665
        %v667 = vsel %vm666, %v658, %v663
        %v668 = vrsqrt.pop %v555
        %v669 = vmul.f32 %v668, %v555
        %v670 = vmul.f32 %v669, %v668
        %v671 = vmul.f32 0.5, %v670
        %v672 = vsub.f32 1.5, %v671
        %v673 = vmul.f32 %v668, %v672
        %vm674 = vweird.f32 %v555
        %vm675 = vweird.f32 %v668
        %vm676 = vmor %vm674, %vm675
        %v677 = vsel %vm676, %v668, %v673
        %v678 = vrsqrt.pop %v556
        %v679 = vmul.f32 %v678, %v556
        %v680 = vmul.f32 %v679, %v678
        %v681 = vmul.f32 0.5, %v680
        %v682 = vsub.f32 1.5, %v681
        %v683 = vmul.f32 %v678, %v682
        %vm684 = vweird.f32 %v556
        %vm685 = vweird.f32 %v678
        %vm686 = vmor %vm684, %vm685
        %v687 = vsel %vm686, %v678, %v683
        %v688 = vrsqrt.pop %v557
        %v689 = vmul.f32 %v688, %v557
        %v690 = vmul.f32 %v689, %v688
        %v691 = vmul.f32 0.5, %v690
        %v692 = vsub.f32 1.5, %v691
        %v693 = vmul.f32 %v688, %v692
        %vm694 = vweird.f32 %v557
        %vm695 = vweird.f32 %v688
        %vm696 = vmor %vm694, %vm695
        %v697 = vsel %vm696, %v688, %v693
        %v698 = vrsqrt.pop %v558
        %v699 = vmul.f32 %v698, %v558
        %v700 = vmul.f32 %v699, %v698
        %v701 = vmul.f32 0.5, %v700
        %v702 = vsub.f32 1.5, %v701
        %v703 = vmul.f32 %v698, %v702
        %vm704 = vweird.f32 %v558
        %vm705 = vweird.f32 %v698
        %vm706 = vmor %vm704, %vm705
        %v707 = vsel %vm706, %v698, %v703
        %v708 = vrsqrt.pop %v559
        %v709 = vmul.f32 %v708, %v559
        %v710 = vmul.f32 %v709, %v708
        %v711 = vmul.f32 0.5, %v710
        %v712 = vsub.f32 1.5, %v711
        %v713 = vmul.f32 %v708, %v712
        %vm714 = vweird.f32 %v559
        %vm715 = vweird.f32 %v708
        %vm716 = vmor %vm714, %vm715
        %v717 = vsel %vm716, %v708, %v713
        %v718 = vrsqrt.pop %v560
        %v719 = vmul.f32 %v718, %v560
        %v720 = vmul.f32 %v719, %v718
        %v721 = vmul.f32 0.5, %v720
        %v722 = vsub.f32 1.5, %v721
        %v723 = vmul.f32 %v718, %v722
        %vm724 = vweird.f32 %v560
        %vm725 = vweird.f32 %v718
        %vm726 = vmor %vm724, %vm725
        %v727 = vsel %vm726, %v718, %v723
        %v728 = vrsqrt.pop %v561
        %v729 = vmul.f32 %v728, %v561
        %v730 = vmul.f32 %v729, %v728
        %v731 = vmul.f32 0.5, %v730
        %v732 = vsub.f32 1.5, %v731
        %v733 = vmul.f32 %v728, %v732
        %vm734 = vweird.f32 %v561
        %vm735 = vweird.f32 %v728
        %vm736 = vmor %vm734, %vm735
        %v737 = vsel %vm736, %v728, %v733
        %v738 = vrsqrt.pop %v562
        %v739 = vmul.f32 %v738, %v562
        %v740 = vmul.f32 %v739, %v738
        %v741 = vmul.f32 0.5, %v740
        %v742 = vsub.f32 1.5, %v741
        %v743 = vmul.f32 %v738, %v742
        %vm744 = vweird.f32 %v562
        %vm745 = vweird.f32 %v738
        %vm746 = vmor %vm744, %vm745
        %v747 = vsel %vm746, %v738, %v743
        %v748 = vrsqrt.pop %v563
        %v749 = vmul.f32 %v748, %v563
        %v750 = vmul.f32 %v749, %v748
        %v751 = vmul.f32 0.5, %v750
        %v752 = vsub.f32 1.5, %v751
        %v753 = vmul.f32 %v748, %v752
        %vm754 = vweird.f32 %v563
        %vm755 = vweird.f32 %v748
        %vm756 = vmor %vm754, %vm755
        %v757 = vsel %vm756, %v748, %v753
        %v758 = vrsqrt.pop %v564
        %v759 = vmul.f32 %v758, %v564
        %v760 = vmul.f32 %v759, %v758
        %v761 = vmul.f32 0.5, %v760
        %v762 = vsub.f32 1.5, %v761
        %v763 = vmul.f32 %v758, %v762
        %vm764 = vweird.f32 %v564
        %vm765 = vweird.f32 %v758
        %vm766 = vmor %vm764, %vm765
        %v767 = vsel %vm766, %v758, %v763
        %v768 = vrsqrt.pop %v565
        %v769 = vmul.f32 %v768, %v565
        %v770 = vmul.f32 %v769, %v768
        %v771 = vmul.f32 0.5, %v770
        %v772 = vsub.f32 1.5, %v771
        %v773 = vmul.f32 %v768, %v772
        %vm774 = vweird.f32 %v565
        %vm775 = vweird.f32 %v768
        %vm776 = vmor %vm774, %vm775
        %v777 = vsel %vm776, %v768, %v773
        %v778 = vrsqrt.pop %v566
        %v779 = vmul.f32 %v778, %v566
        %v780 = vmul.f32 %v779, %v778
        %v781 = vmul.f32 0.5, %v780
        %v782 = vsub.f32 1.5, %v781
        %v783 = vmul.f32 %v778, %v782
        %vm784 = vweird.f32 %v566
        %vm785 = vweird.f32 %v778
        %vm786 = vmor %vm784, %vm785
        %v787 = vsel %vm786, %v778, %v783
        %v788 = vrsqrt.pop %v567
        %v789 = vmul.f32 %v788, %v567
        %v790 = vmul.f32 %v789, %v788
        %v791 = vmul.f32 0.5, %v790
        %v792 = vsub.f32 1.5, %v791
        %v793 = vmul.f32 %v788, %v792
        %vm794 = vweird.f32 %v567
        %vm795 = vweird.f32 %v788
        %vm796 = vmor %vm794, %vm795
        %v797 = vsel %vm796, %v788, %v793
        %v798 = vrsqrt.pop %v568
        %v799 = vmul.f32 %v798, %v568
        %v800 = vmul.f32 %v799, %v798
        %v801 = vmul.f32 0.5, %v800
        %v802 = vsub.f32 1.5, %v801
        %v803 = vmul.f32 %v798, %v802
        %vm804 = vweird.f32 %v568
        %vm805 = vweird.f32 %v798
        %vm806 = vmor %vm804, %vm805
        %v807 = vsel %vm806, %v798, %v803
        %v808 = vrsqrt.pop %v569
        %v809 = vmul.f32 %v808, %v569
        %v810 = vmul.f32 %v809, %v808
        %v811 = vmul.f32 0.5, %v810
        %v812 = vsub.f32 1.5, %v811
        %v813 = vmul.f32 %v808, %v812
        %vm814 = vweird.f32 %v569
        %vm815 = vweird.f32 %v808
        %vm816 = vmor %vm814, %vm815
        %v817 = vsel %vm816, %v808, %v813
        %v818 = vrsqrt.pop %v570
        %v819 = vmul.f32 %v818, %v570
        %v820 = vmul.f32 %v819, %v818
        %v821 = vmul.f32 0.5, %v820
        %v822 = vsub.f32 1.5, %v821
        %v823 = vmul.f32 %v818, %v822
        %vm824 = vweird.f32 %v570
        %vm825 = vweird.f32 %v818
        %vm826 = vmor %vm824, %vm825
        %v827 = vsel %vm826, %v818, %v823
        %v828 = vrsqrt.pop %v571
        %v829 = vmul.f32 %v828, %v571
        %v830 = vmul.f32 %v829, %v828
        %v831 = vmul.f32 0.5, %v830
        %v832 = vsub.f32 1.5, %v831
        %v833 = vmul.f32 %v828, %v832
        %vm834 = vweird.f32 %v571
        %vm835 = vweird.f32 %v828
        %vm836 = vmor %vm834, %vm835
        %v837 = vsel %vm836, %v828, %v833
        %v838 = vrsqrt.pop %v572
        %v839 = vmul.f32 %v838, %v572
        %v840 = vmul.f32 %v839, %v838
        %v841 = vmul.f32 0.5, %v840
        %v842 = vsub.f32 1.5, %v841
        %v843 = vmul.f32 %v838, %v842
        %vm844 = vweird.f32 %v572
        %vm845 = vweird.f32 %v838
        %vm846 = vmor %vm844, %vm845
        %v847 = vsel %vm846, %v838, %v843
        %v848 = vrsqrt.pop %v573
        %v849 = vmul.f32 %v848, %v573
        %v850 = vmul.f32 %v849, %v848
        %v851 = vmul.f32 0.5, %v850
        %v852 = vsub.f32 1.5, %v851
        %v853 = vmul.f32 %v848, %v852
        %vm854 = vweird.f32 %v573
        %vm855 = vweird.f32 %v848
        %vm856 = vmor %vm854, %vm855
        %v857 = vsel %vm856, %v848, %v853
        %v858 = vrsqrt.pop %v574
        %v859 = vmul.f32 %v858, %v574
        %v860 = vmul.f32 %v859, %v858
        %v861 = vmul.f32 0.5, %v860
        %v862 = vsub.f32 1.5, %v861
        %v863 = vmul.f32 %v858, %v862
        %vm864 = vweird.f32 %v574
        %vm865 = vweird.f32 %v858
        %vm866 = vmor %vm864, %vm865
        %v867 = vsel %vm866, %v858, %v863
        %v868 = vrsqrt.pop %v575
        %v869 = vmul.f32 %v868, %v575
        %v870 = vmul.f32 %v869, %v868
        %v871 = vmul.f32 0.5, %v870
        %v872 = vsub.f32 1.5, %v871
        %v873 = vmul.f32 %v868, %v872
        %vm874 = vweird.f32 %v575
        %vm875 = vweird.f32 %v868
        %vm876 = vmor %vm874, %vm875
        %v877 = vsel %vm876, %v868, %v873
        %v878 = vrsqrt.pop %v576
        %v879 = vmul.f32 %v878, %v576
        %v880 = vmul.f32 %v879, %v878
        %v881 = vmul.f32 0.5, %v880
        %v882 = vsub.f32 1.5, %v881
        %v883 = vmul.f32 %v878, %v882
        %vm884 = vweird.f32 %v576
        %vm885 = vweird.f32 %v878
        %vm886 = vmor %vm884, %vm885
        %v887 = vsel %vm886, %v878, %v883
        %v888 = vrsqrt.pop %v577
        %v889 = vmul.f32 %v888, %v577
        %v890 = vmul.f32 %v889, %v888
        %v891 = vmul.f32 0.5, %v890
        %v892 = vsub.f32 1.5, %v891
        %v893 = vmul.f32 %v888, %v892
        %vm894 = vweird.f32 %v577
        %vm895 = vweird.f32 %v888
        %vm896 = vmor %vm894, %vm895
        %v897 = vsel %vm896, %v888, %v893
        %v898 = vmul.f32 %v386, %v587
        %v899 = vmul.f32 %v387, %v597
        %v900 = vmul.f32 %v388, %v607
        %v901 = vmul.f32 %v389, %v617
        %v902 = vmul.f32 %v390, %v627
        %v903 = vmul.f32 %v391, %v637
        %v904 = vmul.f32 %v392, %v647
        %v905 = vmul.f32 %v393, %v657
        %v906 = vmul.f32 %v394, %v667
        %v907 = vmul.f32 %v395, %v677
        %v908 = vmul.f32 %v396, %v687
        %v909 = vmul.f32 %v397, %v697
        %v910 = vmul.f32 %v398, %v707
        %v911 = vmul.f32 %v399, %v717
        %v912 = vmul.f32 %v400, %v727
        %v913 = vmul.f32 %v401, %v737
        %v914 = vmul.f32 %v402, %v747
        %v915 = vmul.f32 %v403, %v757
        %v916 = vmul.f32 %v404, %v767
        %v917 = vmul.f32 %v405, %v777
        %v918 = vmul.f32 %v406, %v787
        %v919 = vmul.f32 %v407, %v797
        %v920 = vmul.f32 %v408, %v807
        %v921 = vmul.f32 %v409, %v817
        %v922 = vmul.f32 %v410, %v827
        %v923 = vmul.f32 %v411, %v837
        %v924 = vmul.f32 %v412, %v847
        %v925 = vmul.f32 %v413, %v857
        %v926 = vmul.f32 %v414, %v867
        %v927 = vmul.f32 %v415, %v877
        %v928 = vmul.f32 %v416, %v887
        %v929 = vmul.f32 %v417, %v897
        %v930 = vld [vmem:[%s1] sm:$0x1]
        %v932 = vperm.slane %v930, 0
        %v934 = vmul.f32 %v898, %v932
        %v935 = vmul.f32 %v899, %v932
        %v936 = vmul.f32 %v900, %v932
        %v937 = vmul.f32 %v901, %v932
        %v938 = vmul.f32 %v902, %v932
        %v939 = vmul.f32 %v903, %v932
        %v940 = vmul.f32 %v904, %v932
        %v941 = vmul.f32 %v905, %v932
        %v942 = vmul.f32 %v906, %v932
        %v943 = vmul.f32 %v907, %v932
        %v944 = vmul.f32 %v908, %v932
        %v945 = vmul.f32 %v909, %v932
        %v946 = vmul.f32 %v910, %v932
        %v947 = vmul.f32 %v911, %v932
        %v948 = vmul.f32 %v912, %v932
        %v949 = vmul.f32 %v913, %v932
        %v950 = vmul.f32 %v914, %v932
        %v951 = vmul.f32 %v915, %v932
        %v952 = vmul.f32 %v916, %v932
        %v953 = vmul.f32 %v917, %v932
        %v954 = vmul.f32 %v918, %v932
        %v955 = vmul.f32 %v919, %v932
        %v956 = vmul.f32 %v920, %v932
        %v957 = vmul.f32 %v921, %v932
        %v958 = vmul.f32 %v922, %v932
        %v959 = vmul.f32 %v923, %v932
        %v960 = vmul.f32 %v924, %v932
        %v961 = vmul.f32 %v925, %v932
        %v962 = vmul.f32 %v926, %v932
        %v963 = vmul.f32 %v927, %v932
        %v964 = vmul.f32 %v928, %v932
        %v965 = vmul.f32 %v929, %v932
        %v966 = vld [vmem:[%s2] sm:$0x1]
        %v968 = vperm.slane %v966, 0
        %v970 = vadd.f32 %v934, %v968
        %v971 = vadd.f32 %v935, %v968
        %v972 = vadd.f32 %v936, %v968
        %v973 = vadd.f32 %v937, %v968
        %v974 = vadd.f32 %v938, %v968
        %v975 = vadd.f32 %v939, %v968
        %v976 = vadd.f32 %v940, %v968
        %v977 = vadd.f32 %v941, %v968
        %v978 = vadd.f32 %v942, %v968
        %v979 = vadd.f32 %v943, %v968
        %v980 = vadd.f32 %v944, %v968
        %v981 = vadd.f32 %v945, %v968
        %v982 = vadd.f32 %v946, %v968
        %v983 = vadd.f32 %v947, %v968
        %v984 = vadd.f32 %v948, %v968
        %v985 = vadd.f32 %v949, %v968
        %v986 = vadd.f32 %v950, %v968
        %v987 = vadd.f32 %v951, %v968
        %v988 = vadd.f32 %v952, %v968
        %v989 = vadd.f32 %v953, %v968
        %v990 = vadd.f32 %v954, %v968
        %v991 = vadd.f32 %v955, %v968
        %v992 = vadd.f32 %v956, %v968
        %v993 = vadd.f32 %v957, %v968
        %v994 = vadd.f32 %v958, %v968
        %v995 = vadd.f32 %v959, %v968
        %v996 = vadd.f32 %v960, %v968
        %v997 = vadd.f32 %v961, %v968
        %v998 = vadd.f32 %v962, %v968
        %v999 = vadd.f32 %v963, %v968
        %v1000 = vadd.f32 %v964, %v968
        %v1001 = vadd.f32 %v965, %v968
        %v1002 = vpack.c.bf16 %v971, %v970
        %v1003 = vpack.c.bf16 %v973, %v972
        %v1004 = vpack.c.bf16 %v975, %v974
        %v1005 = vpack.c.bf16 %v977, %v976
        %v1006 = vpack.c.bf16 %v979, %v978
        %v1007 = vpack.c.bf16 %v981, %v980
        %v1008 = vpack.c.bf16 %v983, %v982
        %v1009 = vpack.c.bf16 %v985, %v984
        %v1010 = vpack.c.bf16 %v987, %v986
        %v1011 = vpack.c.bf16 %v989, %v988
        %v1012 = vpack.c.bf16 %v991, %v990
        %v1013 = vpack.c.bf16 %v993, %v992
        %v1014 = vpack.c.bf16 %v995, %v994
        %v1015 = vpack.c.bf16 %v997, %v996
        %v1016 = vpack.c.bf16 %v999, %v998
        %v1017 = vpack.c.bf16 %v1001, %v1000
        %v1018 = vld [vmem:[%s3] sm:$0xf]
        %v1019 = vld [vmem:[%s3 + $0x4] sm:$0xf]
        %v1020 = vld [vmem:[%s3 + $0x8] sm:$0xf]
        %v1021 = vld [vmem:[%s3 + $0xc] sm:$0xf]
        %v1022 = vld [vmem:[%s3 + $0x10] sm:$0xf]
        %v1023 = vld [vmem:[%s3 + $0x14] sm:$0xf]
        %v1024 = vld [vmem:[%s3 + $0x18] sm:$0xf]
        %v1025 = vld [vmem:[%s3 + $0x1c] sm:$0xf]
        %v1026 = vld [vmem:[%s3 + $0x20] sm:$0xf]
        %v1027 = vld [vmem:[%s3 + $0x24] sm:$0xf]
        %v1028 = vld [vmem:[%s3 + $0x28] sm:$0xf]
        %v1029 = vld [vmem:[%s3 + $0x2c] sm:$0xf]
        %v1030 = vld [vmem:[%s3 + $0x30] sm:$0xf]
        %v1031 = vld [vmem:[%s3 + $0x34] sm:$0xf]
        %v1032 = vld [vmem:[%s3 + $0x38] sm:$0xf]
        %v1033 = vld [vmem:[%s3 + $0x3c] sm:$0xf]
        %v1050 = vunpack.c.l.b16 %v1018
        %v1051 = vunpack.c.l.b16 %v1019
        %v1052 = vunpack.c.l.b16 %v1020
        %v1053 = vunpack.c.l.b16 %v1021
        %v1054 = vunpack.c.l.b16 %v1022
        %v1055 = vunpack.c.l.b16 %v1023
        %v1056 = vunpack.c.l.b16 %v1024
        %v1057 = vunpack.c.l.b16 %v1025
        %v1058 = vunpack.c.l.b16 %v1026
        %v1059 = vunpack.c.l.b16 %v1027
        %v1060 = vunpack.c.l.b16 %v1028
        %v1061 = vunpack.c.l.b16 %v1029
        %v1062 = vunpack.c.l.b16 %v1030
        %v1063 = vunpack.c.l.b16 %v1031
        %v1064 = vunpack.c.l.b16 %v1032
        %v1065 = vunpack.c.l.b16 %v1033
        %v1066 = vpack.c.b16 %v1051, %v1050
        %v1067 = vpack.c.b16 %v1053, %v1052
        %v1068 = vpack.c.b16 %v1055, %v1054
        %v1069 = vpack.c.b16 %v1057, %v1056
        %v1070 = vpack.c.b16 %v1059, %v1058
        %v1071 = vpack.c.b16 %v1061, %v1060
        %v1072 = vpack.c.b16 %v1063, %v1062
        %v1073 = vpack.c.b16 %v1065, %v1064
        %1082 = vmatpush.bf16.msra.mxu0 %v1073
        %1083 = vmatpush.bf16.msra.mxu0 %v1072
        %1084 = vmatpush.bf16.msra.mxu0 %v1071
        %1085 = vmatpush.bf16.msra.mxu0 %v1070
        %1086 = vmatpush.bf16.msra.mxu0 %v1069
        %1087 = vmatpush.bf16.msra.mxu0 %v1068
        %1088 = vmatpush.bf16.msra.mxu0 %v1067
        %1089 = vmatpush.bf16.msra.mxu0 %v1066
        %1090 = vmatmul.bf16.gmra.mxu0 %v1002
        %v1091 = vpop.f32.mrf.mxu0
        %v1092 = vadd.f32 0.0, %v1091
        %v1093 = vpop.f32.mrf.mxu0
        %v1094 = vadd.f32 0.0, %v1093
        %1095 = vmatmul.bf16.gmra.mxu0 %v1003
        %v1096 = vpop.f32.mrf.mxu0
        %v1097 = vadd.f32 0.0, %v1096
        %v1098 = vpop.f32.mrf.mxu0
        %v1099 = vadd.f32 0.0, %v1098
        %1100 = vmatmul.bf16.gmra.mxu0 %v1004
        %v1101 = vpop.f32.mrf.mxu0
        %v1102 = vadd.f32 0.0, %v1101
        %v1103 = vpop.f32.mrf.mxu0
        %v1104 = vadd.f32 0.0, %v1103
        %1105 = vmatmul.bf16.gmra.mxu0 %v1005
        %v1106 = vpop.f32.mrf.mxu0
        %v1107 = vadd.f32 0.0, %v1106
        %v1108 = vpop.f32.mrf.mxu0
        %v1109 = vadd.f32 0.0, %v1108
        %1110 = vmatmul.bf16.gmra.mxu0 %v1006
        %v1111 = vpop.f32.mrf.mxu0
        %v1112 = vadd.f32 0.0, %v1111
        %v1113 = vpop.f32.mrf.mxu0
        %v1114 = vadd.f32 0.0, %v1113
        %1115 = vmatmul.bf16.gmra.mxu0 %v1007
        %v1116 = vpop.f32.mrf.mxu0
        %v1117 = vadd.f32 0.0, %v1116
        %v1118 = vpop.f32.mrf.mxu0
        %v1119 = vadd.f32 0.0, %v1118
        %1120 = vmatmul.bf16.gmra.mxu0 %v1008
        %v1121 = vpop.f32.mrf.mxu0
        %v1122 = vadd.f32 0.0, %v1121
        %v1123 = vpop.f32.mrf.mxu0
        %v1124 = vadd.f32 0.0, %v1123
        %1125 = vmatmul.bf16.gmra.mxu0 %v1009
        %v1126 = vpop.f32.mrf.mxu0
        %v1127 = vadd.f32 0.0, %v1126
        %v1128 = vpop.f32.mrf.mxu0
        %v1129 = vadd.f32 0.0, %v1128
        %1130 = vmatmul.bf16.gmra.mxu0 %v1010
        %v1131 = vpop.f32.mrf.mxu0
        %v1132 = vadd.f32 0.0, %v1131
        %v1133 = vpop.f32.mrf.mxu0
        %v1134 = vadd.f32 0.0, %v1133
        %1135 = vmatmul.bf16.gmra.mxu0 %v1011
        %v1136 = vpop.f32.mrf.mxu0
        %v1137 = vadd.f32 0.0, %v1136
        %v1138 = vpop.f32.mrf.mxu0
        %v1139 = vadd.f32 0.0, %v1138
        %1140 = vmatmul.bf16.gmra.mxu0 %v1012
        %v1141 = vpop.f32.mrf.mxu0
        %v1142 = vadd.f32 0.0, %v1141
        %v1143 = vpop.f32.mrf.mxu0
        %v1144 = vadd.f32 0.0, %v1143
        %1145 = vmatmul.bf16.gmra.mxu0 %v1013
        %v1146 = vpop.f32.mrf.mxu0
        %v1147 = vadd.f32 0.0, %v1146
        %v1148 = vpop.f32.mrf.mxu0
        %v1149 = vadd.f32 0.0, %v1148
        %1150 = vmatmul.bf16.gmra.mxu0 %v1014
        %v1151 = vpop.f32.mrf.mxu0
        %v1152 = vadd.f32 0.0, %v1151
        %v1153 = vpop.f32.mrf.mxu0
        %v1154 = vadd.f32 0.0, %v1153
        %1155 = vmatmul.bf16.gmra.mxu0 %v1015
        %v1156 = vpop.f32.mrf.mxu0
        %v1157 = vadd.f32 0.0, %v1156
        %v1158 = vpop.f32.mrf.mxu0
        %v1159 = vadd.f32 0.0, %v1158
        %1160 = vmatmul.bf16.gmra.mxu0 %v1016
        %v1161 = vpop.f32.mrf.mxu0
        %v1162 = vadd.f32 0.0, %v1161
        %v1163 = vpop.f32.mrf.mxu0
        %v1164 = vadd.f32 0.0, %v1163
        %1165 = vmatmul.bf16.gmra.mxu0 %v1017
        %v1166 = vpop.f32.mrf.mxu0
        %v1167 = vadd.f32 0.0, %v1166
        %v1168 = vpop.f32.mrf.mxu0
        %v1169 = vadd.f32 0.0, %v1168
        %1170 = vdwg.mxu0
        %v1171 = vpack.c.bf16 %v1092, %v1092
        %v1172 = vpack.c.bf16 %v1094, %v1094
        %v1173 = vpack.c.bf16 %v1097, %v1097
        %v1174 = vpack.c.bf16 %v1099, %v1099
        %v1175 = vpack.c.bf16 %v1102, %v1102
        %v1176 = vpack.c.bf16 %v1104, %v1104
        %v1177 = vpack.c.bf16 %v1107, %v1107
        %v1178 = vpack.c.bf16 %v1109, %v1109
        %v1179 = vpack.c.bf16 %v1112, %v1112
        %v1180 = vpack.c.bf16 %v1114, %v1114
        %v1181 = vpack.c.bf16 %v1117, %v1117
        %v1182 = vpack.c.bf16 %v1119, %v1119
        %v1183 = vpack.c.bf16 %v1122, %v1122
        %v1184 = vpack.c.bf16 %v1124, %v1124
        %v1185 = vpack.c.bf16 %v1127, %v1127
        %v1186 = vpack.c.bf16 %v1129, %v1129
        %v1187 = vpack.c.bf16 %v1132, %v1132
        %v1188 = vpack.c.bf16 %v1134, %v1134
        %v1189 = vpack.c.bf16 %v1137, %v1137
        %v1190 = vpack.c.bf16 %v1139, %v1139
        %v1191 = vpack.c.bf16 %v1142, %v1142
        %v1192 = vpack.c.bf16 %v1144, %v1144
        %v1193 = vpack.c.bf16 %v1147, %v1147
        %v1194 = vpack.c.bf16 %v1149, %v1149
        %v1195 = vpack.c.bf16 %v1152, %v1152
        %v1196 = vpack.c.bf16 %v1154, %v1154
        %v1197 = vpack.c.bf16 %v1157, %v1157
        %v1198 = vpack.c.bf16 %v1159, %v1159
        %v1199 = vpack.c.bf16 %v1162, %v1162
        %v1200 = vpack.c.bf16 %v1164, %v1164
        %v1201 = vpack.c.bf16 %v1167, %v1167
        %v1202 = vpack.c.bf16 %v1169, %v1169
        %vm1203 = vcmask 27648
        %1204 = vst.msk [vmem:[%s249] sm:$0xf] %vm1203, %v1171
        %1205 = vst.msk [vmem:[%s249 + $0x4] sm:$0xf] %vm1203, %v1172
        %1206 = vst.msk [vmem:[%s249 + $0x8] sm:$0xf] %vm1203, %v1173
        %1207 = vst.msk [vmem:[%s249 + $0xc] sm:$0xf] %vm1203, %v1174
        %1208 = vst.msk [vmem:[%s249 + $0x10] sm:$0xf] %vm1203, %v1175
        %1209 = vst.msk [vmem:[%s249 + $0x14] sm:$0xf] %vm1203, %v1176
        %1210 = vst.msk [vmem:[%s249 + $0x18] sm:$0xf] %vm1203, %v1177
        %1211 = vst.msk [vmem:[%s249 + $0x1c] sm:$0xf] %vm1203, %v1178
        %1212 = vst.msk [vmem:[%s249 + $0x20] sm:$0xf] %vm1203, %v1179
        %1213 = vst.msk [vmem:[%s249 + $0x24] sm:$0xf] %vm1203, %v1180
        %1214 = vst.msk [vmem:[%s249 + $0x28] sm:$0xf] %vm1203, %v1181
        %1215 = vst.msk [vmem:[%s249 + $0x2c] sm:$0xf] %vm1203, %v1182
        %1216 = vst.msk [vmem:[%s249 + $0x30] sm:$0xf] %vm1203, %v1183
        %1217 = vst.msk [vmem:[%s249 + $0x34] sm:$0xf] %vm1203, %v1184
        %1218 = vst.msk [vmem:[%s249 + $0x38] sm:$0xf] %vm1203, %v1185
        %1219 = vst.msk [vmem:[%s249 + $0x3c] sm:$0xf] %vm1203, %v1186
        %1220 = vst.msk [vmem:[%s249 + $0x40] sm:$0xf] %vm1203, %v1187
        %1221 = vst.msk [vmem:[%s249 + $0x44] sm:$0xf] %vm1203, %v1188
        %1222 = vst.msk [vmem:[%s249 + $0x48] sm:$0xf] %vm1203, %v1189
        %1223 = vst.msk [vmem:[%s249 + $0x4c] sm:$0xf] %vm1203, %v1190
        %1224 = vst.msk [vmem:[%s249 + $0x50] sm:$0xf] %vm1203, %v1191
        %1225 = vst.msk [vmem:[%s249 + $0x54] sm:$0xf] %vm1203, %v1192
        %1226 = vst.msk [vmem:[%s249 + $0x58] sm:$0xf] %vm1203, %v1193
        %1227 = vst.msk [vmem:[%s249 + $0x5c] sm:$0xf] %vm1203, %v1194
        %1228 = vst.msk [vmem:[%s249 + $0x60] sm:$0xf] %vm1203, %v1195
        %1229 = vst.msk [vmem:[%s249 + $0x64] sm:$0xf] %vm1203, %v1196
        %1230 = vst.msk [vmem:[%s249 + $0x68] sm:$0xf] %vm1203, %v1197
        %1231 = vst.msk [vmem:[%s249 + $0x6c] sm:$0xf] %vm1203, %v1198
        %1232 = vst.msk [vmem:[%s249 + $0x70] sm:$0xf] %vm1203, %v1199
        %1233 = vst.msk [vmem:[%s249 + $0x74] sm:$0xf] %vm1203, %v1200
        %1234 = vst.msk [vmem:[%s249 + $0x78] sm:$0xf] %vm1203, %v1201
        %1235 = vst.msk [vmem:[%s249 + $0x7c] sm:$0xf] %vm1203, %v1202
        %s1236 = smul.u32 16, %s23
        %p1237 = scmp.lt.s32.totalorder %s22, 1
        %s1238 = scalar_select %p1237, %s22, 1
        %p1239 = scmp.lt.s32.totalorder %s1236, 15
        %s1240 = scalar_select %p1239, %s1236, 15
        %s1241 = smul.addr %s1240, 2
        %s1242 = smul.addr %s1238, 32
        %s1243 = sadd.s32 %s1241, %s1242
        %s1244 = smul.addr %s1243, 4
        %s1245 = scalar_lea.vmem %s4, %s1244
        // Predicated region
        $region41: #{tpu_custom_call.1} parent=35 // pred_check
          %p1246 = pneg %p141
        $region42: #{tpu_custom_call.1} parent=35 // pred_check_branch
          %1248 = sbr.rel (%p1246) target = $region44
        $region43: #{tpu_custom_call.1} parent=35 // pred_region
          %s1249 = smul.u32 16, %s23
        $region44: #{tpu_custom_call.1} parent=35 // pred_fallthru
          _
      $region36: #{tpu_custom_call.1} parent=5 // pred_fallthru
        _
      %p1250 = scmp.le.s32.totalorder 2, %s13
      // Predicated region
      $region45: #{tpu_custom_call.1} parent=5 // pred_check
        %p1251 = pneg %p1250
      $region46: #{tpu_custom_call.1} parent=5 // pred_check_branch
        %1253 = sbr.rel (%p1251) target = $region48
      $region47: #{tpu_custom_call.1} parent=5 // pred_region
        %s1254 = ssub.s32 %s13, 2
        // Predicated region
        $region49: #{tpu_custom_call.1} parent=47 // pred_check
          %p1255 = pneg %p147
        $region50: #{tpu_custom_call.1} parent=47 // pred_check_branch
          %1257 = sbr.rel (%p1255) target = $region52
        $region51: #{tpu_custom_call.1} parent=47 // pred_region
          %s1258 = smul.u32 16, %s25
          %p1259 = scmp.lt.s32.totalorder %s24, 1
          %s1260 = scalar_select %p1259, %s24, 1
          %p1261 = scmp.lt.s32.totalorder %s1258, 15
          %s1262 = scalar_select %p1261, %s1258, 15
          %s1263 = smul.addr %s1262, 2
          %s1264 = smul.addr %s1260, 32
          %s1265 = sadd.s32 %s1263, %s1264
          %s1266 = smul.addr %s1265, 4
          %s1267 = scalar_lea.vmem %s4, %s1266
        $region52: #{tpu_custom_call.1} parent=47 // pred_fallthru
          _
      $region48: #{tpu_custom_call.1} parent=5 // pred_fallthru
        _
    $region6: #{tpu_custom_call.1} parent=1 // loop_footer
      %s17 = sadd.s32 1, %s13
    $region7: #{tpu_custom_call.1} parent=1 // loop_footer_branch
      %12 = sbr.rel target = $region3
    $region8: #{tpu_custom_call.1} parent=1 // loop_exit
      _
    %1268 = vsyncpa [#allocation3], 1
    %s1269 = scalar_lea.sflag [#allocation3], 1
    %1270 = vsyncpa %s1269, 1

</llo_original>
